<compile_context>
chip_gen: v7x
topology: tpu7x:2x2x1
jax: 0.10.0
libtpu: 0.0.40
codegen_flags: <defaults>
</compile_context>

<pallas_src>
import numpy as np
import jax
import jax.numpy as jnp
from jax import lax
from jax.experimental import pallas as pl
from jax.experimental.pallas import tpu as pltpu


LANE = 128        # TPU lane width (last-dim tile)
SUBLANE = 8       # f32 sublane height (second-to-last-dim tile)
_NEG_BIG = -1e30  # logit for padded (non-existent) classes


def _round_up(x, m):
    return ((x + m - 1) // m) * m


def _choose_batch_tiling(B):
    if B <= LANE:
        B_pad = _round_up(max(B, SUBLANE), SUBLANE)
        return B_pad, B_pad
    B_pad = _round_up(B, LANE)
    return B_pad, LANE


# ----------------------------------------------------------------------------
# Kernel 1: featurizer (tiled over Din) + classifier + entropy + one-hot argmax
# ----------------------------------------------------------------------------
def _adapt_kernel(x_ref, wft_ref, bf_ref, wct_ref, bc_ref,
                  z_ref, ent_ref, yhat_ref, acc_ref):
    k = pl.program_id(1)

    @pl.when(k == 0)
    def _init():
        acc_ref[...] = jnp.zeros_like(acc_ref)

    # z partial: [TILE_B, TILE_K] @ [TILE_K, Dfeat_pad]  (canonical MXU form)
    acc_ref[...] += jnp.dot(x_ref[...], wft_ref[...],
                            preferred_element_type=jnp.float32)

    @pl.when(k == pl.num_programs(1) - 1)
    def _epilogue():
        z = acc_ref[...] + bf_ref[...]
        z_ref[...] = z

        # p = z @ Wc^T + bc  (Wc pre-transposed; padded classes biased -1e30)
        p = jnp.dot(z, wct_ref[...], preferred_element_type=jnp.float32) \
            + bc_ref[...]

        # softmax entropy (padded classes contribute exactly 0).
        # NOTE: exact divide (not pl.reciprocal(approx=True)) on purpose: the
        # entropies drive a top-K ranking, so we keep ordering parity with the
        # f32 reference; this epilogue is O(B*128) and nowhere near the
        # roofline set by the featurizer matmul.
        m = jnp.max(p, axis=-1, keepdims=True)
        e = jnp.exp(p - m)
        s = jnp.sum(e, axis=-1, keepdims=True)
        prob = e / s
        logp = (p - m) - jnp.log(s)
        ent = -jnp.sum(prob * logp, axis=-1, keepdims=True)     # [TILE_B, 1]
        # lane-dense (unmasked) store: broadcast across the 128-lane slab
        ent_ref[...] = jnp.broadcast_to(ent, ent_ref.shape)

        # one-hot(argmax(p)), first-max tie-break (matches torch.argmax)
        ids = lax.broadcasted_iota(jnp.int32, p.shape, 1)
        cand = jnp.where(p == m, ids, p.shape[-1])
        amin = jnp.min(cand, axis=-1, keepdims=True)
        yhat_ref[...] = (ids == amin).astype(jnp.float32)


def adapt_forward(x_pad, wf_t_pad, bf_pad, wc_t_pad, bc_pad, *, tile_b, tile_k):
    B_pad, Din_pad = x_pad.shape
    Dfeat_pad = wf_t_pad.shape[1]
    C_pad = wc_t_pad.shape[1]
    nb = B_pad // tile_b
    nk = Din_pad // tile_k

    grid_spec = pltpu.PrefetchScalarGridSpec(
        num_scalar_prefetch=0,
        grid=(nb, nk),
        in_specs=[
            pl.BlockSpec((tile_b, tile_k), lambda i, k: (i, k)),      # x
            pl.BlockSpec((tile_k, Dfeat_pad), lambda i, k: (k, 0)),   # Wf^T
            pl.BlockSpec((1, Dfeat_pad), lambda i, k: (0, 0)),        # bf
            pl.BlockSpec((Dfeat_pad, C_pad), lambda i, k: (0, 0)),    # Wc^T
            pl.BlockSpec((1, C_pad), lambda i, k: (0, 0)),            # bc
        ],
        out_specs=(
            pl.BlockSpec((tile_b, Dfeat_pad), lambda i, k: (i, 0)),   # z
            pl.BlockSpec((tile_b, LANE), lambda i, k: (i, 0)),        # ent slab
            pl.BlockSpec((tile_b, C_pad), lambda i, k: (i, 0)),       # yhat
        ),
        scratch_shapes=[pltpu.VMEM((tile_b, Dfeat_pad), jnp.float32)],
    )
    z, ent, yhat = pl.pallas_call(
        _adapt_kernel,
        out_shape=(
            jax.ShapeDtypeStruct((B_pad, Dfeat_pad), jnp.float32),
            jax.ShapeDtypeStruct((B_pad, LANE), jnp.float32),
            jax.ShapeDtypeStruct((B_pad, C_pad), jnp.float32),
        ),
        grid_spec=grid_spec,
        compiler_params=pltpu.CompilerParams(
            dimension_semantics=("parallel", "arbitrary")),
    )(x_pad, wf_t_pad, bf_pad, wc_t_pad, bc_pad)
    return z, ent[:, 0], yhat


# ----------------------------------------------------------------------------
# Kernel 2: normalize supports, masked S^T @ L, column-normalize, z @ W
# ----------------------------------------------------------------------------
def _t3a_head_kernel(sup_ref, lab_ref, mask_ref, z_ref, out_ref):
    sup = sup_ref[...]                               # [CAP, Dfeat_pad]
    lab = lab_ref[...]                               # [CAP, C_pad]
    mask = mask_ref[...]                             # [CAP, 1]

    # F.normalize(supports, dim=1) with eps=1e-12 (eps^2 on the squared norm);
    # rsqrt goes to the EUP slot instead of a VPU divide chain.
    rn2 = jnp.sum(sup * sup, axis=-1, keepdims=True)
    sup_m = sup * lax.rsqrt(jnp.maximum(rn2, 1e-24)) * mask

    # weights = supports^T @ labels  -> [Dfeat_pad, C_pad]
    w = lax.dot_general(sup_m, lab, (((0,), (0,)), ((), ())),
                        preferred_element_type=jnp.float32)

    # F.normalize(weights, dim=0)
    cn2 = jnp.sum(w * w, axis=0, keepdims=True)
    w = w * lax.rsqrt(jnp.maximum(cn2, 1e-24))

    out_ref[...] = jnp.dot(z_ref[...], w, preferred_element_type=jnp.float32)


def t3a_head(supports, labels, mask, z_pad):
    B_pad = z_pad.shape[0]
    C_pad = labels.shape[1]
    vmem = pl.BlockSpec(memory_space=pltpu.MemorySpace.VMEM)
    return pl.pallas_call(
        _t3a_head_kernel,
        out_shape=jax.ShapeDtypeStruct((B_pad, C_pad), jnp.float32),
        in_specs=[vmem] * 4,
        out_specs=vmem,
    )(supports, labels, mask.reshape(-1, 1), z_pad)


# ----------------------------------------------------------------------------
# select_supports (plain-JAX glue): per-class lowest-entropy top-K over the
# fixed-capacity buffer, expressed as a static-shape {0,1} mask.
# ----------------------------------------------------------------------------
def select_mask(ent, labels, valid, filter_K, num_classes):
    # TODO(synk): filter_K == -1 path of the PyTorch code not reproduced here.
    y_hat = jnp.argmax(labels[:, :num_classes], axis=1)
    ent_eff = jnp.where(valid, ent, jnp.inf)
    order = jnp.argsort(ent_eff)                       # stable, ascending
    sorted_y = y_hat[order]
    sorted_valid = valid[order].astype(jnp.int32)
    onehot = jax.nn.one_hot(sorted_y, num_classes, dtype=jnp.int32)
    onehot = onehot * sorted_valid[:, None]
    cum = jnp.cumsum(onehot, axis=0) - 1               # within-class rank
    rank_sorted = jnp.take_along_axis(cum, sorted_y[:, None], axis=1)[:, 0]
    rank = jnp.zeros_like(rank_sorted).at[order].set(rank_sorted)
    return ((rank < filter_K) & valid).astype(jnp.float32)


# ----------------------------------------------------------------------------
# Warmup state (setup glue, NumPy so the reference and the module share it)
# ----------------------------------------------------------------------------
def _np_softmax_entropy(p):
    m = p.max(axis=1, keepdims=True)
    e = np.exp(p - m)
    s = e.sum(axis=1, keepdims=True)
    return -((e / s) * ((p - m) - np.log(s))).sum(axis=1)


def _np_warmup(wc, bc, num_classes):
    wc = np.asarray(wc, np.float32)
    bc = np.asarray(bc, np.float32)
    sup = wc.copy()
    prob = sup @ wc.T + bc
    ent = _np_softmax_entropy(prob)
    lab = np.eye(num_classes, dtype=np.float32)[prob.argmax(1)]
    return sup, lab, ent


# ----------------------------------------------------------------------------
# T3A module (state held as fixed-capacity padded arrays; no recompiles)
# ----------------------------------------------------------------------------
class T3A:
    def __init__(self, wf, bf, wc, bc, num_classes, filter_K, max_batch=8):
        Dfeat, Din = wf.shape
        C = num_classes
        self.Din, self.Dfeat, self.C = Din, Dfeat, C
        self.filter_K = filter_K

        # padded / tiled geometry
        self.Dfeat_pad = _round_up(Dfeat, LANE)
        self.C_pad = _round_up(C, LANE)
        # Din reduction tile: 512 keeps the (x + Wf^T) double-buffered tiles
        # well under the v5e 16 MiB scoped-VMEM default and v7x's tighter VMEM.
        self.tile_k = 512 if Din >= 512 else _round_up(Din, LANE)
        self.Din_pad = _round_up(Din, self.tile_k)

        # weights: pre-transpose + zero-pad once (constant across calls).
        # TODO(synk): on v6e/v7x a bf16 copy of Wf^T (with f32 MXU accumulation)
        # would halve DMA bytes; kept f32 here for exact parity with the f32
        # reference.
        wf = jnp.asarray(wf, jnp.float32)
        bf = jnp.asarray(bf, jnp.float32)
        wc = jnp.asarray(wc, jnp.float32)
        bc = jnp.asarray(bc, jnp.float32)
        self.wf_t = jnp.zeros((self.Din_pad, self.Dfeat_pad), jnp.float32)\
            .at[:Din, :Dfeat].set(wf.T)
        self.bf_p = jnp.zeros((1, self.Dfeat_pad), jnp.float32)\
            .at[0, :Dfeat].set(bf)
        self.wc_t = jnp.zeros((self.Dfeat_pad, self.C_pad), jnp.float32)\
            .at[:Dfeat, :C].set(wc.T)
        self.bc_p = jnp.full((1, self.C_pad), _NEG_BIG, jnp.float32)\
            .at[0, :C].set(bc)

        # fixed-capacity support buffers (warmup rows pre-loaded)
        max_keep = C * max(filter_K, 1)
        self.CAP = _round_up(max(C, max_keep) + max_batch, SUBLANE)
        warm_sup, warm_lab, warm_ent = _np_warmup(wc, bc, C)
        self.supports = jnp.zeros((self.CAP, self.Dfeat_pad), jnp.float32)\
            .at[:C, :Dfeat].set(jnp.asarray(warm_sup))
        self.labels = jnp.zeros((self.CAP, self.C_pad), jnp.float32)\
            .at[:C, :C].set(jnp.asarray(warm_lab))
        self.ent = jnp.full((self.CAP,), jnp.inf, jnp.float32)\
            .at[:C].set(jnp.asarray(warm_ent))
        self.valid = jnp.zeros((self.CAP,), bool).at[:C].set(True)
        self.count = C

    def forward(self, x, adapt=True):
        B = x.shape[0]
        x_flat = jnp.asarray(x, jnp.float32).reshape(B, -1)
        B_pad, tile_b = _choose_batch_tiling(B)
        x_pad = jnp.zeros((B_pad, self.Din_pad), jnp.float32)\
            .at[:B, :self.Din].set(x_flat)

        z_pad, ent_pad, yhat_pad = adapt_forward(
            x_pad, self.wf_t, self.bf_p, self.wc_t, self.bc_p,
            tile_b=tile_b, tile_k=self.tile_k)

        if adapt:
            assert self.count + B <= self.CAP, "support buffer capacity exceeded"
            c = self.count
            self.supports = self.supports.at[c:c + B].set(z_pad[:B])
            self.labels = self.labels.at[c:c + B].set(yhat_pad[:B])
            self.ent = self.ent.at[c:c + B].set(ent_pad[:B])
            self.valid = self.valid.at[c:c + B].set(True)
            self.count = c + B

        mask = select_mask(self.ent, self.labels, self.valid,
                           self.filter_K, self.C)

        out_pad = t3a_head(self.supports, self.labels, mask, z_pad)
        out = out_pad[:B, :self.C]

        # prune state (mirrors PyTorch select_supports' side effect) while
        # keeping static shapes: compact selected rows to the front.
        keep = mask > 0.5
        order = jnp.argsort(jnp.logical_not(keep).astype(jnp.int32))
        kept = keep[order]
        self.supports = jnp.where(kept[:, None], self.supports[order], 0.0)
        self.labels = jnp.where(kept[:, None], self.labels[order], 0.0)
        self.ent = jnp.where(kept, self.ent[order], jnp.inf)
        self.valid = kept
        self.count = int(jnp.sum(keep))

        return out


# ----------------------------------------------------------------------------
# Stateful reference: dense math in plain JAX (XLA), the data-dependent
# per-class top-K selection done with NumPy glue (dynamic shapes).
# ----------------------------------------------------------------------------
def ref_t3a_steps(xs, wf, bf, wc, bc, num_classes, filter_K):
    warm_sup, warm_lab, warm_ent = _np_warmup(wc, bc, num_classes)
    sup = jnp.asarray(warm_sup)
    lab = jnp.asarray(warm_lab)
    ent = jnp.asarray(warm_ent)
    outs = []
    for x in xs:
        B = x.shape[0]
        xf = jnp.asarray(x, jnp.float32).reshape(B, -1)
        z = xf @ wf.T + bf
        p = z @ wc.T + bc
        logp = jax.nn.log_softmax(p, axis=1)
        e = -(jax.nn.softmax(p, axis=1) * logp).sum(1)
        yhat = jax.nn.one_hot(jnp.argmax(p, axis=1), num_classes,
                              dtype=jnp.float32)
        sup = jnp.concatenate([sup, z], axis=0)
        lab = jnp.concatenate([lab, yhat], axis=0)
        ent = jnp.concatenate([ent, e], axis=0)
        # select_supports
        ent_np = np.asarray(ent)
        y_np = np.asarray(jnp.argmax(lab, axis=1))
        keep = []
        for c in range(num_classes):
            idx = np.where(y_np == c)[0]
            keep.append(idx[np.argsort(ent_np[idx], kind="stable")][:filter_K])
        keep = jnp.asarray(np.concatenate(keep))
        sup, lab, ent = sup[keep], lab[keep], ent[keep]
        sup_n = sup / jnp.maximum(
            jnp.linalg.norm(sup, axis=1, keepdims=True), 1e-12)
        w = sup_n.T @ lab
        w = w / jnp.maximum(jnp.linalg.norm(w, axis=0, keepdims=True), 1e-12)
        outs.append(z @ w)
    return outs


if __name__ == "__main__":
    # x [B=2, C=4, H=16, W=16] -> Din=1024, Dfeat=32, classes=4
    B, Cin, H, W = 2, 4, 16, 16
    Din = Cin * H * W
    Dfeat = 32
    num_classes = 4
    filter_K = 2

    key = jax.random.PRNGKey(0)
    k1, k2, k3, k4, k5, k6 = jax.random.split(key, 6)
    x1 = jax.random.normal(k1, (B, Cin, H, W), dtype=jnp.float32)
    x2 = jax.random.normal(k6, (B, Cin, H, W), dtype=jnp.float32)
    wf = 0.05 * jax.random.normal(k2, (Dfeat, Din), dtype=jnp.float32)
    bf = 0.05 * jax.random.normal(k3, (Dfeat,), dtype=jnp.float32)
    wc = 0.10 * jax.random.normal(k4, (num_classes, Dfeat), dtype=jnp.float32)
    bc = 0.10 * jax.random.normal(k5, (num_classes,), dtype=jnp.float32)

    model = T3A(wf, bf, wc, bc, num_classes, filter_K, max_batch=B)

    out1 = jax.block_until_ready(model.forward(x1, adapt=True))
    out2 = jax.block_until_ready(model.forward(x2, adapt=True))

    ref1, ref2 = ref_t3a_steps([x1, x2], wf, bf, wc, bc, num_classes, filter_K)
    assert np.allclose(np.asarray(out1), np.asarray(ref1),
                       atol=1e-3, rtol=1e-3), (out1, ref1)
    assert np.allclose(np.asarray(out2), np.asarray(ref2),
                       atol=1e-3, rtol=1e-3), (out2, ref2)

    print("KERNEL_OK")
</pallas_src>

<mosaic_0001>
module attributes {stable_mosaic.version = 11 : i64} {
  func.func @_adapt_kernel(%arg0: i32, %arg1: i32, %arg2: memref<8x512xf32, #tpu.memory_space<vmem>>, %arg3: memref<512x128xf32, #tpu.memory_space<vmem>>, %arg4: memref<1x128xf32, #tpu.memory_space<vmem>>, %arg5: memref<128x128xf32, #tpu.memory_space<vmem>>, %arg6: memref<1x128xf32, #tpu.memory_space<vmem>>, %arg7: memref<8x128xf32, #tpu.memory_space<vmem>>, %arg8: memref<8x128xf32, #tpu.memory_space<vmem>>, %arg9: memref<8x128xf32, #tpu.memory_space<vmem>>, %arg10: memref<8x128xf32, #tpu.memory_space<vmem>>) attributes {dimension_semantics = [#tpu.dimension_semantics<parallel>, #tpu.dimension_semantics<arbitrary>], iteration_bounds = array<i64: 1, 2>, scalar_prefetch = 0 : i64, scratch_operands = 1 : i64, tpu.core_type = #tpu.core_type<tc>, window_params = [{transform_indices = @transform_0, window_bounds = array<i64: 8, 512>}, {transform_indices = @transform_1, window_bounds = array<i64: 512, 128>}, {pipeline_mode = #tpu.pipeline_mode<synchronous>, transform_indices = @transform_2, window_bounds = array<i64: 1, 128>}, {pipeline_mode = #tpu.pipeline_mode<synchronous>, transform_indices = @transform_3, window_bounds = array<i64: 128, 128>}, {pipeline_mode = #tpu.pipeline_mode<synchronous>, transform_indices = @transform_4, window_bounds = array<i64: 1, 128>}, {transform_indices = @transform_5, window_bounds = array<i64: 8, 128>}, {transform_indices = @transform_6, window_bounds = array<i64: 8, 128>}, {transform_indices = @transform_7, window_bounds = array<i64: 8, 128>}]} {
    %c0_i32 = arith.constant 0 : i32
    %0 = arith.cmpi eq, %arg1, %c0_i32 : i32
    %1 = arith.extui %0 : i1 to i32
    %c0_i32_0 = arith.constant 0 : i32
    %2 = arith.cmpi ne, %1, %c0_i32_0 : i32
    scf.if %2 {
      %cst_9 = arith.constant 0.000000e+00 : f32
      %12 = vector.broadcast %cst_9 : f32 to vector<8x128xf32>
      %c0_10 = arith.constant 0 : index
      %c0_11 = arith.constant 0 : index
      %13 = vector.load %arg10[%c0_10, %c0_11] : memref<8x128xf32, #tpu.memory_space<vmem>>, vector<8x128xf32>
      tpu.vector_store %arg10[%c0_10, %c0_11], %12 {strides = array<i32>} : memref<8x128xf32, #tpu.memory_space<vmem>>, vector<8x128xf32>,
    } else {
    }
    %c0 = arith.constant 0 : index
    %c0_1 = arith.constant 0 : index
    %3 = vector.load %arg10[%c0, %c0_1] : memref<8x128xf32, #tpu.memory_space<vmem>>, vector<8x128xf32>
    %c0_2 = arith.constant 0 : index
    %c0_3 = arith.constant 0 : index
    %4 = vector.load %arg2[%c0_2, %c0_3] : memref<8x512xf32, #tpu.memory_space<vmem>>, vector<8x512xf32>
    %c0_4 = arith.constant 0 : index
    %c0_5 = arith.constant 0 : index
    %5 = vector.load %arg3[%c0_4, %c0_5] : memref<512x128xf32, #tpu.memory_space<vmem>>, vector<512x128xf32>
    %cst = arith.constant dense<0.000000e+00> : vector<8x128xf32>
    %6 = tpu.matmul %4, %5, %cst {dimension_numbers = #tpu.dot_dimension_numbers<[1], [0], [0], [1], [0, 0, 1, 1], [], []>} : vector<8x512xf32>, vector<512x128xf32>, vector<8x128xf32> -> vector<8x128xf32>
    %7 = arith.addf %3, %6 : vector<8x128xf32>
    %c0_6 = arith.constant 0 : index
    %c0_7 = arith.constant 0 : index
    %8 = vector.load %arg10[%c0_6, %c0_7] : memref<8x128xf32, #tpu.memory_space<vmem>>, vector<8x128xf32>
    tpu.vector_store %arg10[%c0_6, %c0_7], %7 {strides = array<i32>} : memref<8x128xf32, #tpu.memory_space<vmem>>, vector<8x128xf32>,
    %c1_i32 = arith.constant 1 : i32
    %9 = arith.cmpi eq, %arg1, %c1_i32 : i32
    %10 = arith.extui %9 : i1 to i32
    %c0_i32_8 = arith.constant 0 : i32
    %11 = arith.cmpi ne, %10, %c0_i32_8 : i32
    scf.if %11 {
      %c0_9 = arith.constant 0 : index
      %c0_10 = arith.constant 0 : index
      %12 = vector.load %arg10[%c0_9, %c0_10] : memref<8x128xf32, #tpu.memory_space<vmem>>, vector<8x128xf32>
      %c0_11 = arith.constant 0 : index
      %c0_12 = arith.constant 0 : index
      %13 = vector.load %arg4[%c0_11, %c0_12] : memref<1x128xf32, #tpu.memory_space<vmem>>, vector<1x128xf32>
      %14 = vector.broadcast %13 : vector<1x128xf32> to vector<8x128xf32>
      %15 = arith.addf %12, %14 : vector<8x128xf32>
      %c0_13 = arith.constant 0 : index
      %c0_14 = arith.constant 0 : index
      %16 = vector.load %arg7[%c0_13, %c0_14] : memref<8x128xf32, #tpu.memory_space<vmem>>, vector<8x128xf32>
      tpu.vector_store %arg7[%c0_13, %c0_14], %15 {strides = array<i32>} : memref<8x128xf32, #tpu.memory_space<vmem>>, vector<8x128xf32>,
      %c0_15 = arith.constant 0 : index
      %c0_16 = arith.constant 0 : index
      %17 = vector.load %arg5[%c0_15, %c0_16] : memref<128x128xf32, #tpu.memory_space<vmem>>, vector<128x128xf32>
      %cst_17 = arith.constant dense<0.000000e+00> : vector<8x128xf32>
      %18 = tpu.matmul %15, %17, %cst_17 {dimension_numbers = #tpu.dot_dimension_numbers<[1], [0], [0], [1], [0, 0, 1, 1], [], []>} : vector<8x128xf32>, vector<128x128xf32>, vector<8x128xf32> -> vector<8x128xf32>
      %c0_18 = arith.constant 0 : index
      %c0_19 = arith.constant 0 : index
      %19 = vector.load %arg6[%c0_18, %c0_19] : memref<1x128xf32, #tpu.memory_space<vmem>>, vector<1x128xf32>
      %20 = vector.broadcast %19 : vector<1x128xf32> to vector<8x128xf32>
      %21 = arith.addf %18, %20 : vector<8x128xf32>
      %cst_20 = arith.constant dense<0xFF800000> : vector<8xf32>
      %22 = vector.multi_reduction <maximumf>, %21, %cst_20 [1] : vector<8x128xf32> to vector<8xf32>
      %23 = vector.shape_cast %22 : vector<8xf32> to vector<8x1xf32>
      %24 = vector.broadcast %23 : vector<8x1xf32> to vector<8x128xf32>
      %25 = arith.subf %21, %24 : vector<8x128xf32>
      %26 = math.exp %25 : vector<8x128xf32>
      %cst_21 = arith.constant dense<0.000000e+00> : vector<8xf32>
      %27 = vector.multi_reduction <add>, %26, %cst_21 [1] : vector<8x128xf32> to vector<8xf32>
      %28 = vector.shape_cast %27 : vector<8xf32> to vector<8x1xf32>
      %29 = vector.broadcast %28 : vector<8x1xf32> to vector<8x128xf32>
      %30 = arith.divf %26, %29 : vector<8x128xf32>
      %31 = vector.broadcast %23 : vector<8x1xf32> to vector<8x128xf32>
      %32 = arith.subf %21, %31 : vector<8x128xf32>
      %33 = math.log %28 : vector<8x1xf32>
      %34 = vector.broadcast %33 : vector<8x1xf32> to vector<8x128xf32>
      %35 = arith.subf %32, %34 : vector<8x128xf32>
      %36 = arith.mulf %30, %35 : vector<8x128xf32>
      %cst_22 = arith.constant dense<0.000000e+00> : vector<8xf32>
      %37 = vector.multi_reduction <add>, %36, %cst_22 [1] : vector<8x128xf32> to vector<8xf32>
      %38 = vector.shape_cast %37 : vector<8xf32> to vector<8x1xf32>
      %cst_23 = arith.constant 0.000000e+00 : f32
      %39 = vector.broadcast %cst_23 : f32 to vector<8x1xf32>
      %40 = arith.subf %39, %38 : vector<8x1xf32>
      %41 = vector.shape_cast %40 : vector<8x1xf32> to vector<8x1xf32>
      %42 = vector.broadcast %41 : vector<8x1xf32> to vector<8x128xf32>
      %c0_24 = arith.constant 0 : index
      %c0_25 = arith.constant 0 : index
      %43 = vector.load %arg8[%c0_24, %c0_25] : memref<8x128xf32, #tpu.memory_space<vmem>>, vector<8x128xf32>
      tpu.vector_store %arg8[%c0_24, %c0_25], %42 {strides = array<i32>} : memref<8x128xf32, #tpu.memory_space<vmem>>, vector<8x128xf32>,
      %44 = tpu.iota {dimensions = array<i32: 1>} : vector<8x128xi32>
      %45 = vector.broadcast %23 : vector<8x1xf32> to vector<8x128xf32>
      %46 = arith.cmpf oeq, %21, %45 : vector<8x128xf32>
      %c128_i32 = arith.constant 128 : i32
      %47 = vector.broadcast %c128_i32 : i32 to vector<8x128xi32>
      %48 = arith.select %46, %44, %47 : vector<8x128xi1>, vector<8x128xi32>
      %cst_26 = arith.constant dense<2147483647> : vector<8xi32>
      %49 = vector.multi_reduction <minsi>, %48, %cst_26 [1] : vector<8x128xi32> to vector<8xi32>
      %50 = vector.shape_cast %49 : vector<8xi32> to vector<8x1xi32>
      %51 = vector.broadcast %50 : vector<8x1xi32> to vector<8x128xi32>
      %52 = arith.cmpi eq, %44, %51 : vector<8x128xi32>
      %53 = arith.extui %52 : vector<8x128xi1> to vector<8x128xi32>
      %54 = arith.sitofp %53 : vector<8x128xi32> to vector<8x128xf32>
      %c0_27 = arith.constant 0 : index
      %c0_28 = arith.constant 0 : index
      %55 = vector.load %arg9[%c0_27, %c0_28] : memref<8x128xf32, #tpu.memory_space<vmem>>, vector<8x128xf32>
      tpu.vector_store %arg9[%c0_27, %c0_28], %54 {strides = array<i32>} : memref<8x128xf32, #tpu.memory_space<vmem>>, vector<8x128xf32>,
    } else {
    }
    return
  }
  func.func @transform_0(%arg0: i32, %arg1: i32) -> (i32, i32) {
    %c0_i32 = arith.constant 0 : i32
    return %arg0, %arg1 : i32, i32
  }
  func.func @transform_1(%arg0: i32, %arg1: i32) -> (i32, i32) {
    %c0_i32 = arith.constant 0 : i32
    %c0_i32_0 = arith.constant 0 : i32
    return %arg1, %c0_i32 : i32, i32
  }
  func.func @transform_2(%arg0: i32, %arg1: i32) -> (i32, i32) {
    %c0_i32 = arith.constant 0 : i32
    %c0_i32_0 = arith.constant 0 : i32
    %c0_i32_1 = arith.constant 0 : i32
    return %c0_i32, %c0_i32_0 : i32, i32
  }
  func.func @transform_3(%arg0: i32, %arg1: i32) -> (i32, i32) {
    %c0_i32 = arith.constant 0 : i32
    %c0_i32_0 = arith.constant 0 : i32
    %c0_i32_1 = arith.constant 0 : i32
    return %c0_i32, %c0_i32_0 : i32, i32
  }
  func.func @transform_4(%arg0: i32, %arg1: i32) -> (i32, i32) {
    %c0_i32 = arith.constant 0 : i32
    %c0_i32_0 = arith.constant 0 : i32
    %c0_i32_1 = arith.constant 0 : i32
    return %c0_i32, %c0_i32_0 : i32, i32
  }
  func.func @transform_5(%arg0: i32, %arg1: i32) -> (i32, i32) {
    %c0_i32 = arith.constant 0 : i32
    %c0_i32_0 = arith.constant 0 : i32
    return %arg0, %c0_i32 : i32, i32
  }
  func.func @transform_6(%arg0: i32, %arg1: i32) -> (i32, i32) {
    %c0_i32 = arith.constant 0 : i32
    %c0_i32_0 = arith.constant 0 : i32
    return %arg0, %c0_i32 : i32, i32
  }
  func.func @transform_7(%arg0: i32, %arg1: i32) -> (i32, i32) {
    %c0_i32 = arith.constant 0 : i32
    %c0_i32_0 = arith.constant 0 : i32
    return %arg0, %c0_i32 : i32, i32
  }
}

</mosaic_0001>

<llo_original>
// kernel: tpu_custom_call.1
$region0: #{tpu_custom_call.1}
  #allocation0 [shape = 'u32[]', space=smem, size = 0x4, offset = 0x4, fixed_abs, tag = 'smem constant byte address 0x4 - core index']
  #allocation1 [shape = 'u32[144,128]{1,0:T(1,128)}', space=vmem, size = 0x12000, scoped, tag = 'internal scratch']
  #allocation2 [shape = 'f32[8,128]{1,0:T(8,128)}', space=vmem, size = 0x1000, scoped, tag = 'scratch operand']
  %s0 = inlined_call_operand.hbm [shape: f32[8,1024], index: 0, kind: input, shape index: {}]
  %s1 = inlined_call_operand.hbm [shape: f32[1024,128], index: 1, kind: input, shape index: {}]
  %s2 = inlined_call_operand.vmem [shape: f32[1,128], index: 2, kind: input, shape index: {}]
  %s3 = inlined_call_operand.hbm [shape: f32[128,128], index: 3, kind: input, shape index: {}]
  %s4 = inlined_call_operand.vmem [shape: f32[1,128], index: 4, kind: input, shape index: {}]
  %s5 = inlined_call_operand.hbm [shape: f32[8,128], index: 5, kind: output, shape index: {0}]
  %s6 = inlined_call_operand.hbm [shape: f32[8,128], index: 6, kind: output, shape index: {1}]
  %s7 = inlined_call_operand.hbm [shape: f32[8,128], index: 7, kind: output, shape index: {2}]
  %8 = xla_tuple %s5, %s6, %s7
  %s9 = sld [smem:[#allocation0]]
  $region89: #{tpu_custom_call.1} parent=0
    _
  %s11 = ssub.s32 1, %s9
  %s12 = scalar_select 0, %s11, %s9
  $region1: #{tpu_custom_call.1} parent=0
    #allocation3 [shape = 'u8[32768]{0}', space=vmem, size = 0x8000, scoped, tag = 'input window, operand 0']
    #allocation4 [shape = 's32[2]{0}', space=sflag, size = 0x8, scoped, tag = 'scoped memory for tpu_custom_call.1']
    #allocation5 [shape = 's32[2]{0}', space=sflag, size = 0x8, scoped, tag = 'scoped memory for tpu_custom_call.1']
    #allocation6 [shape = 'u8[524288]{0}', space=vmem, size = 0x80000, scoped, tag = 'input window, operand 1']
    #allocation7 [shape = 's32[2]{0}', space=sflag, size = 0x8, scoped, tag = 'scoped memory for tpu_custom_call.1']
    #allocation8 [shape = 'u8[65536]{0}', space=vmem, size = 0x10000, scoped, tag = 'input window, operand 3, single buffered']
    #allocation9 [shape = 'u8[4096]{0}', space=vmem, size = 0x1000, scoped, tag = 'output window, operand 0, single buffered']
    #allocation10 [shape = 'u8[4096]{0}', space=vmem, size = 0x1000, scoped, tag = 'output window, operand 1, single buffered']
    #allocation11 [shape = 's32[1]{0}', space=sflag, size = 0x4, scoped, tag = 'scoped memory for tpu_custom_call.1']
    #allocation12 [shape = 'u8[4096]{0}', space=vmem, size = 0x1000, scoped, tag = 'output window, operand 2, single buffered']
    %13 = vsyncpa [#allocation4], 0
    %s14 = scalar_lea.sflag [#allocation4], 1
    %15 = vsyncpa %s14, 0
    %16 = vsyncpa [#allocation7], 0
    %s17 = scalar_lea.sflag [#allocation7], 1
    %18 = vsyncpa %s17, 0
    %19 = vsyncpa [#allocation5], 0
    %20 = vsyncpa [#allocation11], 0
    loop: start=0, step=1, limit=4
    $region2: #{tpu_custom_call.1} parent=1 // loop_pre_header
      _
    $region3: #{tpu_custom_call.1} parent=1 // loop_header
      %s22 = sphi 0, %s26
      %p23 = scmp.ge.s32.totalorder %s22, 4
      %s29 = sphi 0, %s41
      %s30 = sphi 0, %s37
      %s31 = sphi 0, %s29
      %s32 = sphi 0, %s30
      %s33 = sphi 0, %s31
      %s34 = sphi 0, %s32
      %s46 = sphi 0, %s48
      %s49 = sphi 0, %s46
      %s50 = sphi 0, %s49
      %s66 = sphi 0, %s50
      %s72 = sphi 0, %s74
      %s75 = sphi 0, %s72
      %s76 = sphi 0, %s75
      %s92 = sphi 0, %s76
      %s96 = sphi 0, %s96
      %s98 = sphi 0, %s96
      %s99 = sphi 0, %s98
      %s113 = sphi 0, %s99
      %s117 = sphi 0, %s117
      %s119 = sphi 0, %s117
      %s120 = sphi 0, %s119
      %s134 = sphi 0, %s120
      %s138 = sphi 0, %s138
      %s140 = sphi 0, %s138
      %s141 = sphi 0, %s140
      %s155 = sphi 0, %s141
      %s161 = sphi 0, %s163
      %s164 = sphi 0, %s161
      %s165 = sphi 0, %s164
      %s181 = sphi 0, %s165
      %s187 = sphi 0, %s189
      %s190 = sphi 0, %s187
      %s191 = sphi 0, %s190
      %s207 = sphi 0, %s191
      %s213 = sphi 0, %s215
      %s216 = sphi 0, %s213
      %s217 = sphi 0, %s216
      %s233 = sphi 0, %s217
    $region4: #{tpu_custom_call.1} parent=1 // loop_header_branch
      %25 = sbr.rel (%p23) target = $region8
    $region5: #{tpu_custom_call.1} parent=1 // loop_body
      %s27 = ssub.s32 %s22, 1
      %s28 = ssub.s32 %s22, 2
      %s35 = sadd.s32 1, %s30
      %p36 = scmp.ge.s32.totalorder %s35, 2
      %s37 = scalar_select %p36, 0, %s35
      %s38 = sadd.s32 1, %s29
      %s39 = scalar_select %p36, %s38, %s29
      %p40 = scmp.ge.s32.totalorder %s39, 1
      %s41 = scalar_select %p40, 0, %s39
      %s42 = ssub.s32 %s29, %s41
      %s43 = ssub.s32 %s30, %s37
      %s44 = sor.u32 %s42, %s43
      %p45 = scmp.eq.s32.totalorder %s44, 0
      %s47 = sadd.s32 %s46, 1
      %s48 = scalar_select %p45, %s46, %s47
      %p51 = pneg %p45
      %p52 = scmp.eq.s32.totalorder %s22, 1
      %p53 = por %p51, %p52
      %p54 = scmp.ne.s32.totalorder %s46, %s49
      %p55 = scmp.eq.s32.totalorder %s22, 0
      %p56 = por %p54, %p55
      %p57 = scmp.ne.s32.totalorder %s46, %s49
      %p58 = scmp.eq.s32.totalorder %s27, 1
      %p59 = por %p57, %p58
      %p60 = scmp.ne.s32.totalorder %s49, %s50
      %p61 = scmp.eq.s32.totalorder %s27, 0
      %p62 = por %p60, %p61
      %p63 = scmp.ne.s32.totalorder %s49, %s50
      %p64 = scmp.eq.s32.totalorder %s28, 1
      %p65 = por %p63, %p64
      %p67 = scmp.ne.s32.totalorder %s50, %s66
      %p68 = scmp.eq.s32.totalorder %s28, 0
      %p69 = por %p67, %p68
      %s70 = ssub.s32 %s30, %s37
      %p71 = scmp.eq.s32.totalorder %s70, 0
      %s73 = sadd.s32 %s72, 1
      %s74 = scalar_select %p71, %s72, %s73
      %p77 = pneg %p71
      %p78 = scmp.eq.s32.totalorder %s22, 1
      %p79 = por %p77, %p78
      %p80 = scmp.ne.s32.totalorder %s72, %s75
      %p81 = scmp.eq.s32.totalorder %s22, 0
      %p82 = por %p80, %p81
      %p83 = scmp.ne.s32.totalorder %s72, %s75
      %p84 = scmp.eq.s32.totalorder %s27, 1
      %p85 = por %p83, %p84
      %p86 = scmp.ne.s32.totalorder %s75, %s76
      %p87 = scmp.eq.s32.totalorder %s27, 0
      %p88 = por %p86, %p87
      %p89 = scmp.ne.s32.totalorder %s75, %s76
      %p90 = scmp.eq.s32.totalorder %s28, 1
      %p91 = por %p89, %p90
      %p93 = scmp.ne.s32.totalorder %s76, %s92
      %p94 = scmp.eq.s32.totalorder %s28, 0
      %p95 = por %p93, %p94
      %s97 = sadd.s32 %s96, 1
      %p100 = scmp.eq.s32.totalorder %s22, 1
      %p101 = scmp.ne.s32.totalorder %s96, %s98
      %p102 = scmp.eq.s32.totalorder %s22, 0
      %p103 = por %p101, %p102
      %p104 = scmp.ne.s32.totalorder %s96, %s98
      %p105 = scmp.eq.s32.totalorder %s27, 1
      %p106 = por %p104, %p105
      %p107 = scmp.ne.s32.totalorder %s98, %s99
      %p108 = scmp.eq.s32.totalorder %s27, 0
      %p109 = por %p107, %p108
      %p110 = scmp.ne.s32.totalorder %s98, %s99
      %p111 = scmp.eq.s32.totalorder %s28, 1
      %p112 = por %p110, %p111
      %p114 = scmp.ne.s32.totalorder %s99, %s113
      %p115 = scmp.eq.s32.totalorder %s28, 0
      %p116 = por %p114, %p115
      %s118 = sadd.s32 %s117, 1
      %p121 = scmp.eq.s32.totalorder %s22, 1
      %p122 = scmp.ne.s32.totalorder %s117, %s119
      %p123 = scmp.eq.s32.totalorder %s22, 0
      %p124 = por %p122, %p123
      %p125 = scmp.ne.s32.totalorder %s117, %s119
      %p126 = scmp.eq.s32.totalorder %s27, 1
      %p127 = por %p125, %p126
      %p128 = scmp.ne.s32.totalorder %s119, %s120
      %p129 = scmp.eq.s32.totalorder %s27, 0
      %p130 = por %p128, %p129
      %p131 = scmp.ne.s32.totalorder %s119, %s120
      %p132 = scmp.eq.s32.totalorder %s28, 1
      %p133 = por %p131, %p132
      %p135 = scmp.ne.s32.totalorder %s120, %s134
      %p136 = scmp.eq.s32.totalorder %s28, 0
      %p137 = por %p135, %p136
      %s139 = sadd.s32 %s138, 1
      %p142 = scmp.eq.s32.totalorder %s22, 1
      %p143 = scmp.ne.s32.totalorder %s138, %s140
      %p144 = scmp.eq.s32.totalorder %s22, 0
      %p145 = por %p143, %p144
      %p146 = scmp.ne.s32.totalorder %s138, %s140
      %p147 = scmp.eq.s32.totalorder %s27, 1
      %p148 = por %p146, %p147
      %p149 = scmp.ne.s32.totalorder %s140, %s141
      %p150 = scmp.eq.s32.totalorder %s27, 0
      %p151 = por %p149, %p150
      %p152 = scmp.ne.s32.totalorder %s140, %s141
      %p153 = scmp.eq.s32.totalorder %s28, 1
      %p154 = por %p152, %p153
      %p156 = scmp.ne.s32.totalorder %s141, %s155
      %p157 = scmp.eq.s32.totalorder %s28, 0
      %p158 = por %p156, %p157
      %s159 = ssub.s32 %s29, %s41
      %p160 = scmp.eq.s32.totalorder %s159, 0
      %s162 = sadd.s32 %s161, 1
      %s163 = scalar_select %p160, %s161, %s162
      %p166 = pneg %p160
      %p167 = scmp.eq.s32.totalorder %s22, 1
      %p168 = por %p166, %p167
      %p169 = scmp.ne.s32.totalorder %s161, %s164
      %p170 = scmp.eq.s32.totalorder %s22, 0
      %p171 = por %p169, %p170
      %p172 = scmp.ne.s32.totalorder %s161, %s164
      %p173 = scmp.eq.s32.totalorder %s27, 1
      %p174 = por %p172, %p173
      %p175 = scmp.ne.s32.totalorder %s164, %s165
      %p176 = scmp.eq.s32.totalorder %s27, 0
      %p177 = por %p175, %p176
      %p178 = scmp.ne.s32.totalorder %s164, %s165
      %p179 = scmp.eq.s32.totalorder %s28, 1
      %p180 = por %p178, %p179
      %p182 = scmp.ne.s32.totalorder %s165, %s181
      %p183 = scmp.eq.s32.totalorder %s28, 0
      %p184 = por %p182, %p183
      %s185 = ssub.s32 %s29, %s41
      %p186 = scmp.eq.s32.totalorder %s185, 0
      %s188 = sadd.s32 %s187, 1
      %s189 = scalar_select %p186, %s187, %s188
      %p192 = pneg %p186
      %p193 = scmp.eq.s32.totalorder %s22, 1
      %p194 = por %p192, %p193
      %p195 = scmp.ne.s32.totalorder %s187, %s190
      %p196 = scmp.eq.s32.totalorder %s22, 0
      %p197 = por %p195, %p196
      %p198 = scmp.ne.s32.totalorder %s187, %s190
      %p199 = scmp.eq.s32.totalorder %s27, 1
      %p200 = por %p198, %p199
      %p201 = scmp.ne.s32.totalorder %s190, %s191
      %p202 = scmp.eq.s32.totalorder %s27, 0
      %p203 = por %p201, %p202
      %p204 = scmp.ne.s32.totalorder %s190, %s191
      %p205 = scmp.eq.s32.totalorder %s28, 1
      %p206 = por %p204, %p205
      %p208 = scmp.ne.s32.totalorder %s191, %s207
      %p209 = scmp.eq.s32.totalorder %s28, 0
      %p210 = por %p208, %p209
      %s211 = ssub.s32 %s29, %s41
      %p212 = scmp.eq.s32.totalorder %s211, 0
      %s214 = sadd.s32 %s213, 1
      %s215 = scalar_select %p212, %s213, %s214
      %p218 = pneg %p212
      %p219 = scmp.eq.s32.totalorder %s22, 1
      %p220 = por %p218, %p219
      %p221 = scmp.ne.s32.totalorder %s213, %s216
      %p222 = scmp.eq.s32.totalorder %s22, 0
      %p223 = por %p221, %p222
      %p224 = scmp.ne.s32.totalorder %s213, %s216
      %p225 = scmp.eq.s32.totalorder %s27, 1
      %p226 = por %p224, %p225
      %p227 = scmp.ne.s32.totalorder %s216, %s217
      %p228 = scmp.eq.s32.totalorder %s27, 0
      %p229 = por %p227, %p228
      %p230 = scmp.ne.s32.totalorder %s216, %s217
      %p231 = scmp.eq.s32.totalorder %s28, 1
      %p232 = por %p230, %p231
      %p234 = scmp.ne.s32.totalorder %s217, %s233
      %p235 = scmp.eq.s32.totalorder %s28, 0
      %p236 = por %p234, %p235
      %p237 = scmp.le.s32.totalorder 1, %s22
      %p238 = scmp.lt.s32.totalorder %s22, 3
      %p239 = pnand %p237, %p238
      %p240 = pneg %p239
      // Predicated region
      $region9: #{tpu_custom_call.1} parent=5 // pred_check
        _
      $region10: #{tpu_custom_call.1} parent=5 // pred_check_branch
        %242 = sbr.rel (%p239) target = $region12
      $region11: #{tpu_custom_call.1} parent=5 // pred_region
        %s243 = ssub.s32 %s22, 1
        // Predicated region
        $region13: #{tpu_custom_call.1} parent=11 // pred_check
          %p244 = pneg %p109
        $region14: #{tpu_custom_call.1} parent=11 // pred_check_branch
          %246 = sbr.rel (%p244) target = $region16
        $region15: #{tpu_custom_call.1} parent=11 // pred_region
          _
        $region16: #{tpu_custom_call.1} parent=11 // pred_fallthru
          _
        // Predicated region
        $region17: #{tpu_custom_call.1} parent=11 // pred_check
          %p247 = pneg %p130
        $region18: #{tpu_custom_call.1} parent=11 // pred_check_branch
          %249 = sbr.rel (%p247) target = $region20
        $region19: #{tpu_custom_call.1} parent=11 // pred_region
          %s251 = ssub.s32 2048, 2048
          %252 = vsyncadd [#allocation7], %s251
          %s253 = sshll.u32 [#allocation8], 4
          %s254 = int_to_ptr.vmem [resolvable:$true] %s253
          %259 = dma.hbm_to_vmem [thread:$0]  %s3, 2048, %s254, [#allocation7], 128, 128, 8
        $region20: #{tpu_custom_call.1} parent=11 // pred_fallthru
          _
        // Predicated region
        $region21: #{tpu_custom_call.1} parent=11 // pred_check
          %p260 = pneg %p151
        $region22: #{tpu_custom_call.1} parent=11 // pred_check_branch
          %262 = sbr.rel (%p260) target = $region24
        $region23: #{tpu_custom_call.1} parent=11 // pred_region
          _
        $region24: #{tpu_custom_call.1} parent=11 // pred_fallthru
          _
      $region12: #{tpu_custom_call.1} parent=5 // pred_fallthru
        _
      %p263 = scmp.lt.s32.totalorder %s22, 2
      // Predicated region
      $region25: #{tpu_custom_call.1} parent=5 // pred_check
        %p264 = pneg %p263
      $region26: #{tpu_custom_call.1} parent=5 // pred_check_branch
        %266 = sbr.rel (%p264) target = $region28
      $region27: #{tpu_custom_call.1} parent=5 // pred_region
        // Predicated region
        $region29: #{tpu_custom_call.1} parent=27 // pred_check
          %p267 = pneg %p56
        $region30: #{tpu_custom_call.1} parent=27 // pred_check_branch
          %269 = sbr.rel (%p267) target = $region32
        $region31: #{tpu_custom_call.1} parent=27 // pred_region
          %s270 = sand.u32 %s46, 1
          %s271 = scalar_lea.sflag [#allocation4], %s270
          %s272 = sand.u32 %s46, 1
          %s273 = smul.addr %s272, 32
          %s274 = scalar_lea.vmem [#allocation3], %s273
          %s275 = smul.u32 4, %s30
          %s277 = ssub.s32 512, 512
          %278 = vsyncadd %s271, %s277
          %s279 = smul.addr %s29, 8
          %s280 = sadd.s32 %s275, %s279
          %s281 = smul.addr %s280, 128
          %s282 = scalar_lea.hbm %s0, %s281
          %s284 = sshll.u32 %s274, 4
          %s285 = int_to_ptr.vmem [resolvable:$true] %s284
          %287 = dma.hbm_to_vmem [thread:$0]  %s282, 512, %s285, %s271
        $region32: #{tpu_custom_call.1} parent=27 // pred_fallthru
          _
        // Predicated region
        $region33: #{tpu_custom_call.1} parent=27 // pred_check
          %p288 = pneg %p82
        $region34: #{tpu_custom_call.1} parent=27 // pred_check_branch
          %290 = sbr.rel (%p288) target = $region36
        $region35: #{tpu_custom_call.1} parent=27 // pred_region
          %s291 = sand.u32 %s22, 1
          %s292 = scalar_lea.sflag [#allocation7], %s291
          %s293 = sand.u32 %s72, 1
          %s294 = smul.addr %s293, 512
          %s295 = scalar_lea.vmem [#allocation6], %s294
          %s296 = smul.u32 64, %s30
          %s298 = ssub.s32 8192, 8192
          %299 = vsyncadd %s292, %s298
          %s300 = smul.addr %s296, 128
          %s301 = scalar_lea.hbm %s1, %s300
          %s302 = sshll.u32 %s295, 4
          %s303 = int_to_ptr.vmem [resolvable:$true] %s302
          %308 = dma.hbm_to_vmem [thread:$0]  %s301, 8192, %s303, %s292, 128, 128, 8
        $region36: #{tpu_custom_call.1} parent=27 // pred_fallthru
          _
      $region28: #{tpu_custom_call.1} parent=5 // pred_fallthru
        _
      %p309 = scmp.le.s32.totalorder 1, %s22
      %p310 = scmp.lt.s32.totalorder %s22, 3
      %p311 = pnand %p309, %p310
      %p312 = pneg %p311
      // Predicated region
      $region37: #{tpu_custom_call.1} parent=5 // pred_check
        _
      $region38: #{tpu_custom_call.1} parent=5 // pred_check_branch
        %314 = sbr.rel (%p311) target = $region40
      $region39: #{tpu_custom_call.1} parent=5 // pred_region
        %s315 = ssub.s32 %s22, 1
        %s316 = sand.u32 %s49, 1
        %s317 = scalar_lea.sflag [#allocation4], %s316
        %s318 = sand.u32 %s49, 1
        %s319 = smul.addr %s318, 32
        %s320 = scalar_lea.vmem [#allocation3], %s319
        // Predicated region
        $region41: #{tpu_custom_call.1} parent=39 // pred_check
          %p321 = pneg %p62
        $region42: #{tpu_custom_call.1} parent=39 // pred_check_branch
          %323 = sbr.rel (%p321) target = $region44
        $region43: #{tpu_custom_call.1} parent=39 // pred_region
          %324 = dma.done %s317, 512
        $region44: #{tpu_custom_call.1} parent=39 // pred_fallthru
          _
        %s325 = sand.u32 %s27, 1
        %s326 = scalar_lea.sflag [#allocation7], %s325
        %s327 = sand.u32 %s75, 1
        %s328 = smul.addr %s327, 512
        %s329 = scalar_lea.vmem [#allocation6], %s328
        // Predicated region
        $region45: #{tpu_custom_call.1} parent=39 // pred_check
          %p330 = pneg %p88
        $region46: #{tpu_custom_call.1} parent=39 // pred_check_branch
          %332 = sbr.rel (%p330) target = $region48
        $region47: #{tpu_custom_call.1} parent=39 // pred_region
          %333 = dma.done %s326, 8192
        $region48: #{tpu_custom_call.1} parent=39 // pred_fallthru
          _
        // Predicated region
        $region49: #{tpu_custom_call.1} parent=39 // pred_check
          %p334 = pneg %p130
        $region50: #{tpu_custom_call.1} parent=39 // pred_check_branch
          %336 = sbr.rel (%p334) target = $region52
        $region51: #{tpu_custom_call.1} parent=39 // pred_region
          %337 = dma.done [#allocation7], 2048
        $region52: #{tpu_custom_call.1} parent=39 // pred_fallthru
          _
        %s338 = sand.u32 %s49, 1
        %s339 = scalar_lea.sflag [#allocation4], %s338
        %s340 = sand.u32 %s49, 1
        %s341 = smul.addr %s340, 32
        %s342 = scalar_lea.vmem [#allocation3], %s341
        %p343 = pneg %p62
        %p344 = pneg %p59
        %s345 = sand.u32 %s27, 1
        %s346 = scalar_lea.sflag [#allocation7], %s345
        %s347 = sand.u32 %s75, 1
        %s348 = smul.addr %s347, 512
        %s349 = scalar_lea.vmem [#allocation6], %s348
        %p350 = pneg %p88
        %p351 = pneg %p85
        %p352 = pneg %p109
        %p353 = pneg %p106
        %p354 = pneg %p130
        %p355 = pneg %p127
        %p356 = pneg %p151
        %p357 = pneg %p148
        %p358 = pneg %p177
        %p359 = pneg %p174
        %p360 = pneg %p203
        %p361 = pneg %p200
        %p362 = pneg %p229
        %p363 = pneg %p226
        %s364 = smul.u32 4, %s32
        %s365 = smul.u32 64, %s32
        %p366 = scmp.eq.s32.totalorder %s32, 0
        // Predicated region
        $region53: #{tpu_custom_call.1} parent=39 // pred_check
          %p367 = pneg %p366
        $region54: #{tpu_custom_call.1} parent=39 // pred_check_branch
          %369 = sbr.rel (%p367) target = $region56
        $region55: #{tpu_custom_call.1} parent=39 // pred_region
          %370 = vst [vmem:[#allocation2] sm:$0xff] 0.0
        $region56: #{tpu_custom_call.1} parent=39 // pred_fallthru
          _
        %v371 = vld [vmem:[#allocation2] sm:$0xff]
        %v372 = vld [vmem:[%s320] sm:$0xff]
        %v373 = vld [vmem:[%s320 + $0x8] sm:$0xff]
        %v374 = vld [vmem:[%s320 + $0x10] sm:$0xff]
        %v375 = vld [vmem:[%s320 + $0x18] sm:$0xff]
        %v376 = vld [vmem:[%s329] sm:$0xff]
        %v377 = vld [vmem:[%s329 + $0x8] sm:$0xff]
        %v378 = vld [vmem:[%s329 + $0x10] sm:$0xff]
        %v379 = vld [vmem:[%s329 + $0x18] sm:$0xff]
        %v380 = vld [vmem:[%s329 + $0x20] sm:$0xff]
        %v381 = vld [vmem:[%s329 + $0x28] sm:$0xff]
        %v382 = vld [vmem:[%s329 + $0x30] sm:$0xff]
        %v383 = vld [vmem:[%s329 + $0x38] sm:$0xff]
        %v384 = vld [vmem:[%s329 + $0x40] sm:$0xff]
        %v385 = vld [vmem:[%s329 + $0x48] sm:$0xff]
        %v386 = vld [vmem:[%s329 + $0x50] sm:$0xff]
        %v387 = vld [vmem:[%s329 + $0x58] sm:$0xff]
        %v388 = vld [vmem:[%s329 + $0x60] sm:$0xff]
        %v389 = vld [vmem:[%s329 + $0x68] sm:$0xff]
        %v390 = vld [vmem:[%s329 + $0x70] sm:$0xff]
        %v391 = vld [vmem:[%s329 + $0x78] sm:$0xff]
        %v392 = vld [vmem:[%s329 + $0x80] sm:$0xff]
        %v393 = vld [vmem:[%s329 + $0x88] sm:$0xff]
        %v394 = vld [vmem:[%s329 + $0x90] sm:$0xff]
        %v395 = vld [vmem:[%s329 + $0x98] sm:$0xff]
        %v396 = vld [vmem:[%s329 + $0xa0] sm:$0xff]
        %v397 = vld [vmem:[%s329 + $0xa8] sm:$0xff]
        %v398 = vld [vmem:[%s329 + $0xb0] sm:$0xff]
        %v399 = vld [vmem:[%s329 + $0xb8] sm:$0xff]
        %v400 = vld [vmem:[%s329 + $0xc0] sm:$0xff]
        %v401 = vld [vmem:[%s329 + $0xc8] sm:$0xff]
        %v402 = vld [vmem:[%s329 + $0xd0] sm:$0xff]
        %v403 = vld [vmem:[%s329 + $0xd8] sm:$0xff]
        %v404 = vld [vmem:[%s329 + $0xe0] sm:$0xff]
        %v405 = vld [vmem:[%s329 + $0xe8] sm:$0xff]
        %v406 = vld [vmem:[%s329 + $0xf0] sm:$0xff]
        %v407 = vld [vmem:[%s329 + $0xf8] sm:$0xff]
        %v408 = vld [vmem:[%s329 + $0x100] sm:$0xff]
        %v409 = vld [vmem:[%s329 + $0x108] sm:$0xff]
        %v410 = vld [vmem:[%s329 + $0x110] sm:$0xff]
        %v411 = vld [vmem:[%s329 + $0x118] sm:$0xff]
        %v412 = vld [vmem:[%s329 + $0x120] sm:$0xff]
        %v413 = vld [vmem:[%s329 + $0x128] sm:$0xff]
        %v414 = vld [vmem:[%s329 + $0x130] sm:$0xff]
        %v415 = vld [vmem:[%s329 + $0x138] sm:$0xff]
        %v416 = vld [vmem:[%s329 + $0x140] sm:$0xff]
        %v417 = vld [vmem:[%s329 + $0x148] sm:$0xff]
        %v418 = vld [vmem:[%s329 + $0x150] sm:$0xff]
        %v419 = vld [vmem:[%s329 + $0x158] sm:$0xff]
        %v420 = vld [vmem:[%s329 + $0x160] sm:$0xff]
        %v421 = vld [vmem:[%s329 + $0x168] sm:$0xff]
        %v422 = vld [vmem:[%s329 + $0x170] sm:$0xff]
        %v423 = vld [vmem:[%s329 + $0x178] sm:$0xff]
        %v424 = vld [vmem:[%s329 + $0x180] sm:$0xff]
        %v425 = vld [vmem:[%s329 + $0x188] sm:$0xff]
        %v426 = vld [vmem:[%s329 + $0x190] sm:$0xff]
        %v427 = vld [vmem:[%s329 + $0x198] sm:$0xff]
        %v428 = vld [vmem:[%s329 + $0x1a0] sm:$0xff]
        %v429 = vld [vmem:[%s329 + $0x1a8] sm:$0xff]
        %v430 = vld [vmem:[%s329 + $0x1b0] sm:$0xff]
        %v431 = vld [vmem:[%s329 + $0x1b8] sm:$0xff]
        %v432 = vld [vmem:[%s329 + $0x1c0] sm:$0xff]
        %v433 = vld [vmem:[%s329 + $0x1c8] sm:$0xff]
        %v434 = vld [vmem:[%s329 + $0x1d0] sm:$0xff]
        %v435 = vld [vmem:[%s329 + $0x1d8] sm:$0xff]
        %v436 = vld [vmem:[%s329 + $0x1e0] sm:$0xff]
        %v437 = vld [vmem:[%s329 + $0x1e8] sm:$0xff]
        %v438 = vld [vmem:[%s329 + $0x1f0] sm:$0xff]
        %v439 = vld [vmem:[%s329 + $0x1f8] sm:$0xff]
        %440 = vmatprep.subr.mxu0 0.0
        %441 = vmatpush1.msra.mxu0 %v376
        %442 = vmatprep.subr.mxu0 0.0
        %443 = vmatpush1.msra.mxu0 %v377
        %444 = vmatprep.subr.mxu0 0.0
        %445 = vmatpush1.msra.mxu0 %v378
        %446 = vmatprep.subr.mxu0 0.0
        %447 = vmatpush1.msra.mxu0 %v379
        %448 = vmatprep.subr.mxu0 0.0
        %449 = vmatpush1.msra.mxu0 %v380
        %450 = vmatprep.subr.mxu0 0.0
        %451 = vmatpush1.msra.mxu0 %v381
        %452 = vmatprep.subr.mxu0 0.0
        %453 = vmatpush1.msra.mxu0 %v382
        %454 = vmatprep.subr.mxu0 0.0
        %455 = vmatpush1.msra.mxu0 %v383
        %456 = vmatprep.subr.mxu0 0.0
        %457 = vmatpush1.msra.mxu0 %v384
        %458 = vmatprep.subr.mxu0 0.0
        %459 = vmatpush1.msra.mxu0 %v385
        %460 = vmatprep.subr.mxu0 0.0
        %461 = vmatpush1.msra.mxu0 %v386
        %462 = vmatprep.subr.mxu0 0.0
        %463 = vmatpush1.msra.mxu0 %v387
        %464 = vmatprep.subr.mxu0 0.0
        %465 = vmatpush1.msra.mxu0 %v388
        %466 = vmatprep.subr.mxu0 0.0
        %467 = vmatpush1.msra.mxu0 %v389
        %468 = vmatprep.subr.mxu0 0.0
        %469 = vmatpush1.msra.mxu0 %v390
        %470 = vmatprep.subr.mxu0 0.0
        %471 = vmatpush1.msra.mxu0 %v391
        %472 = vmatprep.subr.mxu0 0.0
        %473 = vmatpush1.msra.mxu0 %v392
        %474 = vmatprep.subr.mxu0 0.0
        %475 = vmatpush1.msra.mxu0 %v393
        %476 = vmatprep.subr.mxu0 0.0
        %477 = vmatpush1.msra.mxu0 %v394
        %478 = vmatprep.subr.mxu0 0.0
        %479 = vmatpush1.msra.mxu0 %v395
        %480 = vmatprep.subr.mxu0 0.0
        %481 = vmatpush1.msra.mxu0 %v396
        %482 = vmatprep.subr.mxu0 0.0
        %483 = vmatpush1.msra.mxu0 %v397
        %484 = vmatprep.subr.mxu0 0.0
        %485 = vmatpush1.msra.mxu0 %v398
        %486 = vmatprep.subr.mxu0 0.0
        %487 = vmatpush1.msra.mxu0 %v399
        %488 = vmatprep.subr.mxu0 0.0
        %489 = vmatpush1.msra.mxu0 %v400
        %490 = vmatprep.subr.mxu0 0.0
        %491 = vmatpush1.msra.mxu0 %v401
        %492 = vmatprep.subr.mxu0 0.0
        %493 = vmatpush1.msra.mxu0 %v402
        %494 = vmatprep.subr.mxu0 0.0
        %495 = vmatpush1.msra.mxu0 %v403
        %496 = vmatprep.subr.mxu0 0.0
        %497 = vmatpush1.msra.mxu0 %v404
        %498 = vmatprep.subr.mxu0 0.0
        %499 = vmatpush1.msra.mxu0 %v405
        %500 = vmatprep.subr.mxu0 0.0
        %501 = vmatpush1.msra.mxu0 %v406
        %502 = vmatprep.subr.mxu0 0.0
        %503 = vmatpush1.msra.mxu0 %v407
        %504 = vmatprep.mubr.f32.mxu0 %v373
        %505 = vmatmul.mubr.f32.gmra.mrb[0].mxu0 %v372
        %v506 = vpop.f32.mrb[0].mxu0
        %v507 = vadd.f32 0.0, %v506
        %v508 = vpop.f32.mrb[0].mxu0
        %509 = vdwg.mxu0
        %510 = vmatprep.subr.mxu0 0.0
        %511 = vmatpush1.msra.mxu0 %v408
        %512 = vmatprep.subr.mxu0 0.0
        %513 = vmatpush1.msra.mxu0 %v409
        %514 = vmatprep.subr.mxu0 0.0
        %515 = vmatpush1.msra.mxu0 %v410
        %516 = vmatprep.subr.mxu0 0.0
        %517 = vmatpush1.msra.mxu0 %v411
        %518 = vmatprep.subr.mxu0 0.0
        %519 = vmatpush1.msra.mxu0 %v412
        %520 = vmatprep.subr.mxu0 0.0
        %521 = vmatpush1.msra.mxu0 %v413
        %522 = vmatprep.subr.mxu0 0.0
        %523 = vmatpush1.msra.mxu0 %v414
        %524 = vmatprep.subr.mxu0 0.0
        %525 = vmatpush1.msra.mxu0 %v415
        %526 = vmatprep.subr.mxu0 0.0
        %527 = vmatpush1.msra.mxu0 %v416
        %528 = vmatprep.subr.mxu0 0.0
        %529 = vmatpush1.msra.mxu0 %v417
        %530 = vmatprep.subr.mxu0 0.0
        %531 = vmatpush1.msra.mxu0 %v418
        %532 = vmatprep.subr.mxu0 0.0
        %533 = vmatpush1.msra.mxu0 %v419
        %534 = vmatprep.subr.mxu0 0.0
        %535 = vmatpush1.msra.mxu0 %v420
        %536 = vmatprep.subr.mxu0 0.0
        %537 = vmatpush1.msra.mxu0 %v421
        %538 = vmatprep.subr.mxu0 0.0
        %539 = vmatpush1.msra.mxu0 %v422
        %540 = vmatprep.subr.mxu0 0.0
        %541 = vmatpush1.msra.mxu0 %v423
        %542 = vmatprep.subr.mxu0 0.0
        %543 = vmatpush1.msra.mxu0 %v424
        %544 = vmatprep.subr.mxu0 0.0
        %545 = vmatpush1.msra.mxu0 %v425
        %546 = vmatprep.subr.mxu0 0.0
        %547 = vmatpush1.msra.mxu0 %v426
        %548 = vmatprep.subr.mxu0 0.0
        %549 = vmatpush1.msra.mxu0 %v427
        %550 = vmatprep.subr.mxu0 0.0
        %551 = vmatpush1.msra.mxu0 %v428
        %552 = vmatprep.subr.mxu0 0.0
        %553 = vmatpush1.msra.mxu0 %v429
        %554 = vmatprep.subr.mxu0 0.0
        %555 = vmatpush1.msra.mxu0 %v430
        %556 = vmatprep.subr.mxu0 0.0
        %557 = vmatpush1.msra.mxu0 %v431
        %558 = vmatprep.subr.mxu0 0.0
        %559 = vmatpush1.msra.mxu0 %v432
        %560 = vmatprep.subr.mxu0 0.0
        %561 = vmatpush1.msra.mxu0 %v433
        %562 = vmatprep.subr.mxu0 0.0
        %563 = vmatpush1.msra.mxu0 %v434
        %564 = vmatprep.subr.mxu0 0.0
        %565 = vmatpush1.msra.mxu0 %v435
        %566 = vmatprep.subr.mxu0 0.0
        %567 = vmatpush1.msra.mxu0 %v436
        %568 = vmatprep.subr.mxu0 0.0
        %569 = vmatpush1.msra.mxu0 %v437
        %570 = vmatprep.subr.mxu0 0.0
        %571 = vmatpush1.msra.mxu0 %v438
        %572 = vmatprep.subr.mxu0 0.0
        %573 = vmatpush1.msra.mxu0 %v439
        %574 = vmatprep.mubr.f32.mxu0 %v375
        %575 = vmatmul.mubr.f32.gmra.mrb[0].mxu0 %v374
        %v576 = vpop.f32.mrb[0].mxu0
        %v577 = vadd.f32 %v507, %v576
        %v578 = vpop.f32.mrb[0].mxu0
        %579 = vdwg.mxu0
        %v580 = vadd.f32 %v371, %v577
        %581 = vst [vmem:[#allocation2] sm:$0xff] %v580
        %p582 = scmp.eq.s32.totalorder %s32, 1
        // Predicated region
        $region57: #{tpu_custom_call.1} parent=39 // pred_check
          %p583 = pneg %p582
        $region58: #{tpu_custom_call.1} parent=39 // pred_check_branch
          %585 = sbr.rel (%p583) target = $region60
        $region59: #{tpu_custom_call.1} parent=39 // pred_region
          %v586 = vld [vmem:[#allocation2] sm:$0xff]
          %v587 = vld [vmem:[%s2] sm:$0x1]
          %v589 = vlaneseq
          %v590 = vshrl.u32 %v589, 7
          %v591 = vsub.s32 0, %v590
          %v592 = vrot.slane %v587, %v591
          %v594 = vadd.f32 %v586, %v592
          %595 = vst [vmem:[#allocation9] sm:$0xff] %v594
          %v596 = vld [vmem:[#allocation8] sm:$0xff]
          %v597 = vld [vmem:[#allocation8 + $0x8] sm:$0xff]
          %v598 = vld [vmem:[#allocation8 + $0x10] sm:$0xff]
          %v599 = vld [vmem:[#allocation8 + $0x18] sm:$0xff]
          %v600 = vld [vmem:[#allocation8 + $0x20] sm:$0xff]
          %v601 = vld [vmem:[#allocation8 + $0x28] sm:$0xff]
          %v602 = vld [vmem:[#allocation8 + $0x30] sm:$0xff]
          %v603 = vld [vmem:[#allocation8 + $0x38] sm:$0xff]
          %v604 = vld [vmem:[#allocation8 + $0x40] sm:$0xff]
          %v605 = vld [vmem:[#allocation8 + $0x48] sm:$0xff]
          %v606 = vld [vmem:[#allocation8 + $0x50] sm:$0xff]
          %v607 = vld [vmem:[#allocation8 + $0x58] sm:$0xff]
          %v608 = vld [vmem:[#allocation8 + $0x60] sm:$0xff]
          %v609 = vld [vmem:[#allocation8 + $0x68] sm:$0xff]
          %v610 = vld [vmem:[#allocation8 + $0x70] sm:$0xff]
          %v611 = vld [vmem:[#allocation8 + $0x78] sm:$0xff]
          %v612 = vld [vmem:[%s4] sm:$0x1]
          %v614 = vlaneseq
          %v615 = vshrl.u32 %v614, 7
          %v616 = vsub.s32 0, %v615
          %v617 = vrot.slane %v612, %v616
          %619 = vmatprep.subr.mxu0 0.0
          %620 = vmatpush1.msra.mxu0 %v596
          %621 = vmatprep.subr.mxu0 0.0
          %622 = vmatpush1.msra.mxu0 %v597
          %623 = vmatprep.subr.mxu0 0.0
          %624 = vmatpush1.msra.mxu0 %v598
          %625 = vmatprep.subr.mxu0 0.0
          %626 = vmatpush1.msra.mxu0 %v599
          %627 = vmatprep.subr.mxu0 0.0
          %628 = vmatpush1.msra.mxu0 %v600
          %629 = vmatprep.subr.mxu0 0.0
          %630 = vmatpush1.msra.mxu0 %v601
          %631 = vmatprep.subr.mxu0 0.0
          %632 = vmatpush1.msra.mxu0 %v602
          %633 = vmatprep.subr.mxu0 0.0
          %634 = vmatpush1.msra.mxu0 %v603
          %635 = vmatprep.subr.mxu0 0.0
          %636 = vmatpush1.msra.mxu0 %v604
          %637 = vmatprep.subr.mxu0 0.0
          %638 = vmatpush1.msra.mxu0 %v605
          %639 = vmatprep.subr.mxu0 0.0
          %640 = vmatpush1.msra.mxu0 %v606
          %641 = vmatprep.subr.mxu0 0.0
          %642 = vmatpush1.msra.mxu0 %v607
          %643 = vmatprep.subr.mxu0 0.0
          %644 = vmatpush1.msra.mxu0 %v608
          %645 = vmatprep.subr.mxu0 0.0
          %646 = vmatpush1.msra.mxu0 %v609
          %647 = vmatprep.subr.mxu0 0.0
          %648 = vmatpush1.msra.mxu0 %v610
          %649 = vmatprep.subr.mxu0 0.0
          %650 = vmatpush1.msra.mxu0 %v611
          %651 = vmatprep.subr.mxu0 0.0
          %652 = vmatpush1.msra.mxu0 0.0
          %653 = vmatprep.subr.mxu0 0.0
          %654 = vmatpush1.msra.mxu0 0.0
          %655 = vmatprep.subr.mxu0 0.0
          %656 = vmatpush1.msra.mxu0 0.0
          %657 = vmatprep.subr.mxu0 0.0
          %658 = vmatpush1.msra.mxu0 0.0
          %659 = vmatprep.subr.mxu0 0.0
          %660 = vmatpush1.msra.mxu0 0.0
          %661 = vmatprep.subr.mxu0 0.0
          %662 = vmatpush1.msra.mxu0 0.0
          %663 = vmatprep.subr.mxu0 0.0
          %664 = vmatpush1.msra.mxu0 0.0
          %665 = vmatprep.subr.mxu0 0.0
          %666 = vmatpush1.msra.mxu0 0.0
          %667 = vmatprep.subr.mxu0 0.0
          %668 = vmatpush1.msra.mxu0 0.0
          %669 = vmatprep.subr.mxu0 0.0
          %670 = vmatpush1.msra.mxu0 0.0
          %671 = vmatprep.subr.mxu0 0.0
          %672 = vmatpush1.msra.mxu0 0.0
          %673 = vmatprep.subr.mxu0 0.0
          %674 = vmatpush1.msra.mxu0 0.0
          %675 = vmatprep.subr.mxu0 0.0
          %676 = vmatpush1.msra.mxu0 0.0
          %677 = vmatprep.subr.mxu0 0.0
          %678 = vmatpush1.msra.mxu0 0.0
          %679 = vmatprep.subr.mxu0 0.0
          %680 = vmatpush1.msra.mxu0 0.0
          %681 = vmatprep.subr.mxu0 0.0
          %682 = vmatpush1.msra.mxu0 0.0
          %683 = vmatprep.mubr.f32.mxu0 0.0
          %684 = vmatmul.mubr.f32.gmra.mrb[0].mxu0 %v594
          %v685 = vpop.f32.mrb[0].mxu0
          %v686 = vadd.f32 %v617, %v685
          %v687 = vpop.f32.mrb[0].mxu0
          %688 = vdwg.mxu0
          %689 = vmax.xlane.f32.xlu0 %v686
          %v690 = vpop.xlane.xlu0 %689
          %v691 = vsub.f32 %v686, %v690
          %v692 = vmul.f32 %v691, 1.442695
          %v693 = vpow.pop %v692
          %694 = vadd.xlane.f32.xlu0 %v693
          %v695 = vpop.xlane.xlu0 %694
          %v696 = vrcp.pop %v695
          %v697 = vmul.f32 %v693, %v696
          %v698 = vlog2.pop %v695
          %v699 = vmul.f32 %v698, 0.6931472
          %v700 = vsub.f32 %v691, %v699
          %v701 = vmul.f32 %v697, %v700
          %702 = vadd.xlane.f32.xlu0 %v701
          %v703 = vpop.xlane.xlu0 %702
          %v704 = vsub.f32 0.0, %v703
          %705 = vst [vmem:[#allocation10] sm:$0xff] %v704
          %v706 = vlaneseq
          %v707 = vand.u32 %v706, 127
          %vm708 = vcmp.eq.f32.partialorder %v686, %v690
          %v709 = vsel %vm708, %v707, 128
          %v710 = vand.u32 %v709, 65535
          %v711 = vshra.s32 %v709, 16
          %v712 = vcvt.s32.f32 %v710
          %v713 = vcvt.s32.f32 %v711
          %714 = vmin.xlane.f32.xlu0 %v713
          %v715 = vpop.xlane.xlu0 %714
          %vm716 = vcmp.eq.f32.partialorder %v713, %v715
          %v717 = vsel %vm716, %v712, inf
          %718 = vmin.xlane.f32.xlu0 %v717
          %v719 = vpop.xlane.xlu0 %718
          %v720 = vcvt.f32.s32 %v719
          %v721 = vcvt.f32.s32 %v715
          %v722 = vshll.u32 %v721, 16
          %v723 = vadd.s32 %v722, %v720
          %vm724 = vcmp.eq.s32.totalorder %v707, %v723
          %v725 = vsel %vm724, 1, 0
          %v726 = vcvt.s32.f32 %v725
          %727 = vst [vmem:[#allocation12] sm:$0xff] %v726
        $region60: #{tpu_custom_call.1} parent=39 // pred_fallthru
          _
        // Predicated region
        $region61: #{tpu_custom_call.1} parent=39 // pred_check
          %p728 = pneg %p174
        $region62: #{tpu_custom_call.1} parent=39 // pred_check_branch
          %730 = sbr.rel (%p728) target = $region64
        $region63: #{tpu_custom_call.1} parent=39 // pred_region
          %s732 = ssub.s32 128, 128
          %733 = vsyncadd [#allocation5], %s732
          %s734 = smul.addr %s31, 128
          %s735 = scalar_lea.hbm %s5, %s734
          %s737 = sshll.u32 [#allocation9], 4
          %s738 = int_to_ptr.vmem [resolvable:$true] %s737
          %740 = dma.vmem_to_hbm [thread:$0]  %s738, 128, %s735, [#allocation5]
        $region64: #{tpu_custom_call.1} parent=39 // pred_fallthru
          _
        // Predicated region
        $region65: #{tpu_custom_call.1} parent=39 // pred_check
          %p741 = pneg %p200
        $region66: #{tpu_custom_call.1} parent=39 // pred_check_branch
          %743 = sbr.rel (%p741) target = $region68
        $region67: #{tpu_custom_call.1} parent=39 // pred_region
          %s745 = ssub.s32 128, 128
          %746 = vsyncadd [#allocation11], %s745
          %s747 = smul.addr %s31, 128
          %s748 = scalar_lea.hbm %s6, %s747
          %s750 = sshll.u32 [#allocation10], 4
          %s751 = int_to_ptr.vmem [resolvable:$true] %s750
          %753 = dma.vmem_to_hbm [thread:$0]  %s751, 128, %s748, [#allocation11]
        $region68: #{tpu_custom_call.1} parent=39 // pred_fallthru
          _
        // Predicated region
        $region69: #{tpu_custom_call.1} parent=39 // pred_check
          %p754 = pneg %p226
        $region70: #{tpu_custom_call.1} parent=39 // pred_check_branch
          %756 = sbr.rel (%p754) target = $region72
        $region71: #{tpu_custom_call.1} parent=39 // pred_region
          %s758 = ssub.s32 128, 128
          %759 = vsyncadd [#allocation11], %s758
          %s760 = smul.addr %s31, 128
          %s761 = scalar_lea.hbm %s7, %s760
          %s763 = sshll.u32 [#allocation12], 4
          %s764 = int_to_ptr.vmem [resolvable:$true] %s763
          %766 = dma.vmem_to_hbm [thread:$0]  %s764, 128, %s761, [#allocation11]
        $region72: #{tpu_custom_call.1} parent=39 // pred_fallthru
          _
        // Predicated region
        $region73: #{tpu_custom_call.1} parent=39 // pred_check
          %p767 = pneg %p174
        $region74: #{tpu_custom_call.1} parent=39 // pred_check_branch
          %769 = sbr.rel (%p767) target = $region76
        $region75: #{tpu_custom_call.1} parent=39 // pred_region
          %770 = dma.done [#allocation5], 128
        $region76: #{tpu_custom_call.1} parent=39 // pred_fallthru
          _
        // Predicated region
        $region77: #{tpu_custom_call.1} parent=39 // pred_check
          %p771 = pneg %p200
        $region78: #{tpu_custom_call.1} parent=39 // pred_check_branch
          %773 = sbr.rel (%p771) target = $region80
        $region79: #{tpu_custom_call.1} parent=39 // pred_region
          %774 = dma.done [#allocation11], 128
        $region80: #{tpu_custom_call.1} parent=39 // pred_fallthru
          _
        // Predicated region
        $region81: #{tpu_custom_call.1} parent=39 // pred_check
          %p775 = pneg %p226
        $region82: #{tpu_custom_call.1} parent=39 // pred_check_branch
          %777 = sbr.rel (%p775) target = $region84
        $region83: #{tpu_custom_call.1} parent=39 // pred_region
          %778 = dma.done [#allocation11], 128
        $region84: #{tpu_custom_call.1} parent=39 // pred_fallthru
          _
      $region40: #{tpu_custom_call.1} parent=5 // pred_fallthru
        _
      %p779 = scmp.le.s32.totalorder 2, %s22
      // Predicated region
      $region85: #{tpu_custom_call.1} parent=5 // pred_check
        %p780 = pneg %p779
      $region86: #{tpu_custom_call.1} parent=5 // pred_check_branch
        %782 = sbr.rel (%p780) target = $region88
      $region87: #{tpu_custom_call.1} parent=5 // pred_region
        %s783 = ssub.s32 %s22, 2
      $region88: #{tpu_custom_call.1} parent=5 // pred_fallthru
        _
    $region6: #{tpu_custom_call.1} parent=1 // loop_footer
      %s26 = sadd.s32 1, %s22
    $region7: #{tpu_custom_call.1} parent=1 // loop_footer_branch
      %21 = sbr.rel target = $region3
    $region8: #{tpu_custom_call.1} parent=1 // loop_exit
      _
    %784 = vsyncpa [#allocation4], 1
    %s785 = scalar_lea.sflag [#allocation4], 1
    %786 = vsyncpa %s785, 1
    %787 = vsyncpa [#allocation7], 1
    %s788 = scalar_lea.sflag [#allocation7], 1
    %789 = vsyncpa %s788, 1
    %790 = vsyncpa [#allocation5], 1
    %s791 = scalar_lea.sflag [#allocation5], 1
    %792 = vsyncpa %s791, 1
    %793 = vsyncpa [#allocation11], 1

</llo_original>
